<compile_context>
chip_gen: v7x
topology: tpu7x:2x2x1
jax: 0.10.0
libtpu: 0.0.40
codegen_flags: <defaults>
</compile_context>

<pallas_src>
import functools

import jax
import jax.numpy as jnp
from jax import lax
from jax.experimental import pallas as pl
from jax.experimental.pallas import tpu as pltpu


_LANE = 128


# ------------------------------ tiling helpers ------------------------------

def _round_up(x, m):
    return (x + m - 1) // m * m


def _largest_divisor(n, cap):
    d = 1
    for b in range(1, min(n, max(cap, 1)) + 1):
        if n % b == 0:
            d = b
    return d


@functools.lru_cache(maxsize=None)
def _vmem_params():
    """(vmem_limit_bytes, tile_budget_bytes) scaled to the actual chip."""
    cap = 64 * 1024 * 1024                        # conservative default (v7x)
    try:
        info = pltpu.get_tpu_info()
        cap = int(getattr(info, "vmem_capacity_bytes", cap))
    except Exception:
        pass
    limit = min(cap * 3 // 4, 96 * 1024 * 1024)   # ~48 MiB v7x, ~96 MiB v5e/v6e
    budget = limit * 2 // 3
    return limit, budget


def _block_m_pad(m):
    """Block-wide row padding: prefer a 512 granule unless it wastes >12.5%."""
    for g in (512, 256, _LANE):
        mp = _round_up(m, g)
        if mp - m <= m // 8 or g == _LANE:
            return mp
    return _round_up(m, _LANE)


def _choose_matmul_tiles(m_pad, k_pad, c_pad, out_bytes, budget):
    """(tm, tk): multiples of 128 dividing (m_pad, k_pad), weights resident."""
    nm, nk = m_pad // _LANE, k_pad // _LANE
    # Resident bf16 weights (counted double-buffered) + the two stats blocks.
    fixed = 2 * k_pad * c_pad * 2 + 4 * 8 * c_pad * 4
    avail = budget - fixed
    best_tm, best_tk = _LANE, _LANE
    for d in sorted((d for d in range(1, nk + 1) if nk % d == 0), reverse=True):
        tk = _LANE * d
        per_row = (2 * tk * 2                     # bf16 LHS tile, dbl-buffered
                   + 2 * c_pad * out_bytes        # output tile
                   + (c_pad * 4 if out_bytes < 4 else 0))  # f32 acc (bf16 out)
        cap = max(avail // per_row // _LANE, 1) if avail > 0 else 1
        tm = _LANE * _largest_divisor(nm, min(int(cap), 16))    # tm <= 2048
        if tm >= min(512, m_pad) and tk >= min(256, k_pad):
            return tm, tk
        if tm > best_tm or (tm == best_tm and tk > best_tk):
            best_tm, best_tk = tm, tk
    # TODO(synk): fall back to K-streamed (non-resident) weights if even the
    # smallest tiles exceed the budget for very large K*C layers.
    return best_tm, best_tk


def _choose_row_tile(m_pad, c_pad, n_arrays, budget):
    """Row tile for the elementwise BN pass; target multi-MiB blocks."""
    nm = m_pad // _LANE
    per_row = 2 * n_arrays * c_pad * 4
    cap = max(budget // per_row // _LANE, 1)
    return _LANE * _largest_divisor(nm, min(int(cap), 32))      # tm <= 4096


# ----------------------------- Pallas kernels -------------------------------

def _conv_stats_kernel(x_ref, w_ref, o_ref, psum_ref, psq_ref, *acc, tk):
    """K-tiled matmul with resident weights; BN sum/sumsq fused in epilogue.

    The f32 output block is resident across the K axis so it doubles as the
    accumulator; a VMEM scratch accumulator is only used for bf16 outputs.
    """
    k_i = pl.program_id(1)
    acc_ref = acc[0] if acc else o_ref

    @pl.when(k_i == 0)
    def _():
        acc_ref[...] = jnp.zeros_like(acc_ref)

    k0 = pl.multiple_of(k_i * tk, _LANE)
    acc_ref[...] += jnp.dot(x_ref[...], w_ref[pl.ds(k0, tk), :],
                            preferred_element_type=jnp.float32)

    @pl.when(k_i == pl.num_programs(1) - 1)
    def _():
        y = acc_ref[...]
        if acc:                                   # separate acc -> cast out
            o_ref[...] = y.astype(o_ref.dtype)
        # Row 0 carries the per-M-tile partial sums; rows 1..7 stay zero so
        # the (8, C_pad) stats block remains sublane-aligned.
        mask = (lax.broadcasted_iota(jnp.int32, psum_ref.shape, 0) == 0)
        mask = mask.astype(jnp.float32)
        psum_ref[...] = mask * jnp.sum(y, axis=0, keepdims=True)
        psq_ref[...] = mask * jnp.sum(y * y, axis=0, keepdims=True)


def _bn_kernel(y_ref, s_ref, b_ref, o_ref, *, relu):
    out = y_ref[...].astype(jnp.float32) * s_ref[...] + b_ref[...]
    if relu:
        out = jnp.maximum(out, 0.0)
    o_ref[...] = out.astype(o_ref.dtype)


def _bn_res_kernel(y_ref, s_ref, b_ref, r_ref, o_ref, *, relu):
    out = (y_ref[...].astype(jnp.float32) * s_ref[...] + b_ref[...]
           + r_ref[...].astype(jnp.float32))
    if relu:
        out = jnp.maximum(out, 0.0)
    o_ref[...] = out.astype(o_ref.dtype)


# ------------------------------ op wrappers ----------------------------------

def _im2col(x_nhwc, kh, kw, stride, pad):
    # TODO(synk): replace with an in-kernel direct conv (shifted matmuls with
    # halo DMA) so the kh*kw-expanded patch matrix never hits HBM.
    x = jnp.pad(x_nhwc, ((0, 0), (pad, pad), (pad, pad), (0, 0)))
    n, hp, wp, c = x.shape
    ho = (hp - kh) // stride + 1
    wo = (wp - kw) // stride + 1
    taps = [x[:, i:i + stride * ho:stride, j:j + stride * wo:stride, :]
            for i in range(kh) for j in range(kw)]
    p = jnp.stack(taps, axis=3)                   # (N, Ho, Wo, kh*kw, C)
    return p.reshape(n * ho * wo, kh * kw * c), (n, ho, wo)


def _matmul_bn_stats(patches, w2d, c_out, m_pad, out_dtype):
    """patches (M,K) bf16 @ w2d (K,C_out) bf16 -> (m_pad, C_pad) out_dtype,
    plus fused per-channel partial sum / sum-of-squares (f32)."""
    vmem_limit, budget = _vmem_params()
    m, k = patches.shape
    c_pad = _round_up(c_out, _LANE)
    k_pad = _round_up(k, _LANE)
    out_bytes = 2 if out_dtype == jnp.bfloat16 else 4
    tm, tk = _choose_matmul_tiles(m_pad, k_pad, c_pad, out_bytes, budget)

    patches = jnp.pad(patches, ((0, m_pad - m), (0, k_pad - k)))
    w2d = jnp.pad(w2d, ((0, k_pad - k), (0, c_pad - c_out)))

    n_m, n_k = m_pad // tm, k_pad // tk
    scratch = [] if out_bytes == 4 else [pltpu.VMEM((tm, c_pad), jnp.float32)]
    y, psum, psq = pl.pallas_call(
        functools.partial(_conv_stats_kernel, tk=tk),
        out_shape=(jax.ShapeDtypeStruct((m_pad, c_pad), out_dtype),
                   jax.ShapeDtypeStruct((n_m * 8, c_pad), jnp.float32),
                   jax.ShapeDtypeStruct((n_m * 8, c_pad), jnp.float32)),
        grid=(n_m, n_k),
        in_specs=[pl.BlockSpec((tm, tk), lambda i, kk: (i, kk)),
                  # Full weight matrix resident in VMEM: fetched once, reused
                  # across every M tile and every K step.
                  pl.BlockSpec((k_pad, c_pad), lambda i, kk: (0, 0))],
        out_specs=(pl.BlockSpec((tm, c_pad), lambda i, kk: (i, 0)),
                   pl.BlockSpec((8, c_pad), lambda i, kk: (i, 0)),
                   pl.BlockSpec((8, c_pad), lambda i, kk: (i, 0))),
        scratch_shapes=scratch,
        compiler_params=pltpu.CompilerParams(
            dimension_semantics=("parallel", "arbitrary"),
            vmem_limit_bytes=vmem_limit),
    )(patches, w2d)
    return y, psum, psq, c_pad


def bn_scale_bias(psum, psq, count, gamma, beta, c_pad, eps=1e-5):
    """Fold training-mode BatchNorm (batch mean / biased var) into scale+bias."""
    s = jnp.sum(psum, axis=0)
    q = jnp.sum(psq, axis=0)
    mean = s / count
    # TODO(synk): shifted / two-pass variance for large-magnitude activations;
    # E[y^2] - mean^2 can cancel catastrophically (clamped at 0 here).
    var = jnp.maximum(q / count - mean * mean, 0.0)
    g = jnp.pad(gamma.astype(jnp.float32), (0, c_pad - gamma.shape[0]))
    b = jnp.pad(beta.astype(jnp.float32), (0, c_pad - beta.shape[0]))
    inv = g * lax.rsqrt(var + eps)
    return inv.reshape(1, c_pad), (b - mean * inv).reshape(1, c_pad)


def bn_apply(y, scale, bias, relu=False, residual=None, out_dtype=jnp.float32):
    """Fused y*scale + bias (+residual) (+ReLU), lane-dense row tiles."""
    vmem_limit, budget = _vmem_params()
    m_pad, c_pad = y.shape
    n_arrays = 2 if residual is None else 3
    tm = _choose_row_tile(m_pad, c_pad, n_arrays, budget)
    grid = (m_pad // tm,)
    row_spec = pl.BlockSpec((tm, c_pad), lambda i: (i, 0))
    vec_spec = pl.BlockSpec((1, c_pad), lambda i: (0, 0))
    params = pltpu.CompilerParams(dimension_semantics=("parallel",),
                                  vmem_limit_bytes=vmem_limit)
    out_shape = jax.ShapeDtypeStruct((m_pad, c_pad), out_dtype)
    if residual is None:
        return pl.pallas_call(
            functools.partial(_bn_kernel, relu=relu),
            out_shape=out_shape, grid=grid,
            in_specs=[row_spec, vec_spec, vec_spec],
            out_specs=row_spec, compiler_params=params,
        )(y, scale, bias)
    return pl.pallas_call(
        functools.partial(_bn_res_kernel, relu=relu),
        out_shape=out_shape, grid=grid,
        in_specs=[row_spec, vec_spec, vec_spec, row_spec],
        out_specs=row_spec, compiler_params=params,
    )(y, scale, bias, residual)


# ------------------------------ model glue -----------------------------------

def resnet_basic_block(x_nhwc, p, downsampling):
    c_in = x_nhwc.shape[-1]
    c_out = p["conv1_w"].shape[0]

    # conv1 (3x3, stride=ds): im2col once; the 1x1 shortcut reuses its
    # centre-tap columns so x is only gathered once per block.
    patches1, (n, ho, wo) = _im2col(x_nhwc.astype(jnp.bfloat16), 3, 3,
                                    downsampling, 1)
    m = n * ho * wo
    m_pad = _block_m_pad(m)

    w1 = jnp.transpose(p["conv1_w"], (2, 3, 1, 0)).reshape(9 * c_in, c_out)
    y1, s1, q1, c_pad = _matmul_bn_stats(patches1, w1.astype(jnp.bfloat16),
                                         c_out, m_pad, jnp.bfloat16)
    sc1, bi1 = bn_scale_bias(s1, q1, m, p["bn1_g"], p["bn1_b"], c_pad)
    a1 = bn_apply(y1, sc1, bi1, relu=True, out_dtype=jnp.bfloat16)
    a1_nhwc = a1[:m, :c_out].reshape(n, ho, wo, c_out)

    # conv2 (3x3, stride=1) -> BN; the block output stays f32.
    patches2, _ = _im2col(a1_nhwc, 3, 3, 1, 1)
    w2 = jnp.transpose(p["conv2_w"], (2, 3, 1, 0)).reshape(9 * c_out, c_out)
    y2, s2, q2, _ = _matmul_bn_stats(patches2, w2.astype(jnp.bfloat16),
                                     c_out, m_pad, jnp.float32)
    sc2, bi2 = bn_scale_bias(s2, q2, m, p["bn2_g"], p["bn2_b"], c_pad)

    if "sc_w" in p:
        # 1x1/stride-ds shortcut: its im2col is exactly the centre tap of
        # conv1's 3x3 patch matrix (same stride, same output positions).
        centre = 4 * c_in
        ws = p["sc_w"].reshape(c_out, c_in).T.astype(jnp.bfloat16)
        ys, ss, qs, _ = _matmul_bn_stats(patches1[:, centre:centre + c_in], ws,
                                         c_out, m_pad, jnp.float32)
        scs, bis = bn_scale_bias(ss, qs, m, p["sc_g"], p["sc_b"], c_pad)
        res = bn_apply(ys, scs, bis, relu=False)
    else:
        res = x_nhwc.reshape(-1, c_in)
        res = jnp.pad(res, ((0, m_pad - res.shape[0]), (0, c_pad - c_in)))

    # Final BN(y2) + residual (no activation after the add, per ResidualBlock).
    out = bn_apply(y2, sc2, bi2, relu=False, residual=res)
    return out[:m, :c_out].reshape(n, ho, wo, c_out)


def resnet_layer(x_nchw, params_list, in_channels, out_channels):
    downsampling = 2 if in_channels != out_channels else 1
    x = jnp.transpose(x_nchw, (0, 2, 3, 1)).astype(jnp.float32)  # NCHW -> NHWC
    for i, p in enumerate(params_list):
        x = resnet_basic_block(x, p, downsampling if i == 0 else 1)
    return jnp.transpose(x, (0, 3, 1, 2))                        # NHWC -> NCHW


# ------------------------ deterministic parameters ---------------------------

def make_block_params(key, in_c, out_c):
    k1, k2, k3 = jax.random.split(key, 3)
    p = {
        "conv1_w": 0.1 * jax.random.normal(k1, (out_c, in_c, 3, 3), jnp.float32),
        "bn1_g": jnp.ones((out_c,), jnp.float32),
        "bn1_b": jnp.zeros((out_c,), jnp.float32),
        "conv2_w": 0.1 * jax.random.normal(k2, (out_c, out_c, 3, 3), jnp.float32),
        "bn2_g": jnp.ones((out_c,), jnp.float32),
        "bn2_b": jnp.zeros((out_c,), jnp.float32),
    }
    if in_c != out_c:  # expansion = 1 -> expanded_channels == out_c
        p["sc_w"] = 0.1 * jax.random.normal(k3, (out_c, in_c, 1, 1), jnp.float32)
        p["sc_g"] = jnp.ones((out_c,), jnp.float32)
        p["sc_b"] = jnp.zeros((out_c,), jnp.float32)
    return p


# ---------------------------- pure-JAX reference -----------------------------

def _ref_conv(x_nhwc, w_oihw, stride, pad):
    w_hwio = jnp.transpose(w_oihw, (2, 3, 1, 0))
    return lax.conv_general_dilated(
        x_nhwc, w_hwio, (stride, stride),
        padding=((pad, pad), (pad, pad)),
        dimension_numbers=("NHWC", "HWIO", "NHWC"))


def _ref_bn(y, gamma, beta, eps=1e-5):
    mean = y.mean(axis=(0, 1, 2))
    var = y.var(axis=(0, 1, 2))
    return (y - mean) / jnp.sqrt(var + eps) * gamma + beta


def ref_layer(x_nchw, params_list, in_channels, out_channels):
    downsampling = 2 if in_channels != out_channels else 1
    x = jnp.transpose(x_nchw, (0, 2, 3, 1)).astype(jnp.float32)
    for i, p in enumerate(params_list):
        ds = downsampling if i == 0 else 1
        y1 = _ref_bn(_ref_conv(x, p["conv1_w"], ds, 1), p["bn1_g"], p["bn1_b"])
        a1 = jnp.maximum(y1, 0.0)
        y2 = _ref_bn(_ref_conv(a1, p["conv2_w"], 1, 1), p["bn2_g"], p["bn2_b"])
        if "sc_w" in p:
            res = _ref_bn(_ref_conv(x, p["sc_w"], ds, 0), p["sc_g"], p["sc_b"])
        else:
            res = x
        x = y2 + res
    return jnp.transpose(x, (0, 3, 1, 2))


# ----------------------------------- main -------------------------------------

if __name__ == "__main__":
    N, Cin, Cout, H, W = 2, 4, 8, 16, 16
    n_blocks = 1

    key = jax.random.PRNGKey(0)
    kx, kp = jax.random.split(key)
    x = jax.random.normal(kx, (N, Cin, H, W), jnp.float32)   # NCHW, like PyTorch

    params_list = []
    pkeys = jax.random.split(kp, n_blocks)
    for i in range(n_blocks):
        ic = Cin if i == 0 else Cout
        params_list.append(make_block_params(pkeys[i], ic, Cout))

    out = jax.block_until_ready(resnet_layer(x, params_list, Cin, Cout))
    ref = jax.block_until_ready(ref_layer(x, params_list, Cin, Cout))

    assert out.shape == ref.shape == (N, Cout, H // 2, W // 2)
    err = float(jnp.max(jnp.abs(out - ref)))
    if not (jnp.isfinite(err) and err < 5e-2):
        raise RuntimeError(f"mismatch vs reference, max abs err = {err}")

    print("KERNEL_OK")
</pallas_src>

<mosaic_0001>
module attributes {stable_mosaic.version = 11 : i64} {
  func.func @_conv_stats_kernel(%arg0: i32, %arg1: i32, %arg2: memref<128x128xbf16, #tpu.memory_space<vmem>>, %arg3: memref<128x128xbf16, #tpu.memory_space<vmem>>, %arg4: memref<128x128xbf16, #tpu.memory_space<vmem>>, %arg5: memref<8x128xf32, #tpu.memory_space<vmem>>, %arg6: memref<8x128xf32, #tpu.memory_space<vmem>>, %arg7: memref<128x128xf32, #tpu.memory_space<vmem>>) attributes {dimension_semantics = [#tpu.dimension_semantics<parallel>, #tpu.dimension_semantics<arbitrary>], iteration_bounds = array<i64: 1, 1>, scalar_prefetch = 0 : i64, scratch_operands = 1 : i64, tpu.core_type = #tpu.core_type<tc>, window_params = [{transform_indices = @transform_0, window_bounds = array<i64: 128, 128>}, {pipeline_mode = #tpu.pipeline_mode<synchronous>, transform_indices = @transform_1, window_bounds = array<i64: 128, 128>}, {transform_indices = @transform_2, window_bounds = array<i64: 128, 128>}, {transform_indices = @transform_3, window_bounds = array<i64: 8, 128>}, {transform_indices = @transform_4, window_bounds = array<i64: 8, 128>}]} {
    %c0_i32 = arith.constant 0 : i32
    %0 = arith.cmpi eq, %arg1, %c0_i32 : i32
    %1 = arith.extui %0 : i1 to i32
    %c0_i32_0 = arith.constant 0 : i32
    %2 = arith.cmpi ne, %1, %c0_i32_0 : i32
    scf.if %2 {
      %cst_9 = arith.constant 0.000000e+00 : f32
      %15 = vector.broadcast %cst_9 : f32 to vector<128x128xf32>
      %c0_10 = arith.constant 0 : index
      %c0_11 = arith.constant 0 : index
      %16 = vector.load %arg7[%c0_10, %c0_11] : memref<128x128xf32, #tpu.memory_space<vmem>>, vector<128x128xf32>
      tpu.vector_store %arg7[%c0_10, %c0_11], %15 {strides = array<i32>} : memref<128x128xf32, #tpu.memory_space<vmem>>, vector<128x128xf32>,
    } else {
    }
    %c128_i32 = arith.constant 128 : i32
    %3 = arith.muli %arg1, %c128_i32 : i32
    %4 = tpu.assume_multiple %3, 128 : i32
    %c0 = arith.constant 0 : index
    %c0_1 = arith.constant 0 : index
    %5 = vector.load %arg7[%c0, %c0_1] : memref<128x128xf32, #tpu.memory_space<vmem>>, vector<128x128xf32>
    %c0_2 = arith.constant 0 : index
    %c0_3 = arith.constant 0 : index
    %6 = vector.load %arg2[%c0_2, %c0_3] : memref<128x128xbf16, #tpu.memory_space<vmem>>, vector<128x128xbf16>
    %7 = arith.index_cast %4 : i32 to index
    %c0_4 = arith.constant 0 : index
    %8 = vector.load %arg3[%7, %c0_4] : memref<128x128xbf16, #tpu.memory_space<vmem>>, vector<128x128xbf16>
    %cst = arith.constant dense<0.000000e+00> : vector<128x128xf32>
    %9 = tpu.matmul %6, %8, %cst {dimension_numbers = #tpu.dot_dimension_numbers<[1], [0], [0], [1], [0, 0, 1, 1], [], []>} : vector<128x128xbf16>, vector<128x128xbf16>, vector<128x128xf32> -> vector<128x128xf32>
    %10 = arith.addf %5, %9 : vector<128x128xf32>
    %c0_5 = arith.constant 0 : index
    %c0_6 = arith.constant 0 : index
    %11 = vector.load %arg7[%c0_5, %c0_6] : memref<128x128xf32, #tpu.memory_space<vmem>>, vector<128x128xf32>
    tpu.vector_store %arg7[%c0_5, %c0_6], %10 {strides = array<i32>} : memref<128x128xf32, #tpu.memory_space<vmem>>, vector<128x128xf32>,
    %c0_i32_7 = arith.constant 0 : i32
    %12 = arith.cmpi eq, %arg1, %c0_i32_7 : i32
    %13 = arith.extui %12 : i1 to i32
    %c0_i32_8 = arith.constant 0 : i32
    %14 = arith.cmpi ne, %13, %c0_i32_8 : i32
    scf.if %14 {
      %c0_9 = arith.constant 0 : index
      %c0_10 = arith.constant 0 : index
      %15 = vector.load %arg7[%c0_9, %c0_10] : memref<128x128xf32, #tpu.memory_space<vmem>>, vector<128x128xf32>
      %16 = arith.truncf %15 : vector<128x128xf32> to vector<128x128xbf16>
      %c0_11 = arith.constant 0 : index
      %c0_12 = arith.constant 0 : index
      %17 = vector.load %arg4[%c0_11, %c0_12] : memref<128x128xbf16, #tpu.memory_space<vmem>>, vector<128x128xbf16>
      tpu.vector_store %arg4[%c0_11, %c0_12], %16 {strides = array<i32>} : memref<128x128xbf16, #tpu.memory_space<vmem>>, vector<128x128xbf16>,
      %18 = tpu.iota {dimensions = array<i32: 0>} : vector<8x128xi32>
      %c0_i32_13 = arith.constant 0 : i32
      %19 = vector.broadcast %c0_i32_13 : i32 to vector<8x128xi32>
      %20 = arith.cmpi eq, %18, %19 : vector<8x128xi32>
      %21 = arith.extui %20 : vector<8x128xi1> to vector<8x128xi32>
      %22 = arith.sitofp %21 : vector<8x128xi32> to vector<8x128xf32>
      %cst_14 = arith.constant dense<0.000000e+00> : vector<128xf32>
      %23 = vector.multi_reduction <add>, %15, %cst_14 [0] : vector<128x128xf32> to vector<128xf32>
      %24 = vector.shape_cast %23 : vector<128xf32> to vector<1x128xf32>
      %25 = vector.broadcast %24 : vector<1x128xf32> to vector<8x128xf32>
      %26 = arith.mulf %22, %25 : vector<8x128xf32>
      %c0_15 = arith.constant 0 : index
      %c0_16 = arith.constant 0 : index
      %27 = vector.load %arg5[%c0_15, %c0_16] : memref<8x128xf32, #tpu.memory_space<vmem>>, vector<8x128xf32>
      tpu.vector_store %arg5[%c0_15, %c0_16], %26 {strides = array<i32>} : memref<8x128xf32, #tpu.memory_space<vmem>>, vector<8x128xf32>,
      %28 = arith.mulf %15, %15 : vector<128x128xf32>
      %cst_17 = arith.constant dense<0.000000e+00> : vector<128xf32>
      %29 = vector.multi_reduction <add>, %28, %cst_17 [0] : vector<128x128xf32> to vector<128xf32>
      %30 = vector.shape_cast %29 : vector<128xf32> to vector<1x128xf32>
      %31 = vector.broadcast %30 : vector<1x128xf32> to vector<8x128xf32>
      %32 = arith.mulf %22, %31 : vector<8x128xf32>
      %c0_18 = arith.constant 0 : index
      %c0_19 = arith.constant 0 : index
      %33 = vector.load %arg6[%c0_18, %c0_19] : memref<8x128xf32, #tpu.memory_space<vmem>>, vector<8x128xf32>
      tpu.vector_store %arg6[%c0_18, %c0_19], %32 {strides = array<i32>} : memref<8x128xf32, #tpu.memory_space<vmem>>, vector<8x128xf32>,
    } else {
    }
    return
  }
  func.func @transform_0(%arg0: i32, %arg1: i32) -> (i32, i32) {
    %c0_i32 = arith.constant 0 : i32
    return %arg0, %arg1 : i32, i32
  }
  func.func @transform_1(%arg0: i32, %arg1: i32) -> (i32, i32) {
    %c0_i32 = arith.constant 0 : i32
    %c0_i32_0 = arith.constant 0 : i32
    %c0_i32_1 = arith.constant 0 : i32
    return %c0_i32, %c0_i32_0 : i32, i32
  }
  func.func @transform_2(%arg0: i32, %arg1: i32) -> (i32, i32) {
    %c0_i32 = arith.constant 0 : i32
    %c0_i32_0 = arith.constant 0 : i32
    return %arg0, %c0_i32 : i32, i32
  }
  func.func @transform_3(%arg0: i32, %arg1: i32) -> (i32, i32) {
    %c0_i32 = arith.constant 0 : i32
    %c0_i32_0 = arith.constant 0 : i32
    return %arg0, %c0_i32 : i32, i32
  }
  func.func @transform_4(%arg0: i32, %arg1: i32) -> (i32, i32) {
    %c0_i32 = arith.constant 0 : i32
    %c0_i32_0 = arith.constant 0 : i32
    return %arg0, %c0_i32 : i32, i32
  }
}

</mosaic_0001>

<llo_original>
// kernel: tpu_custom_call.1
$region0: #{tpu_custom_call.1}
  #allocation0 [shape = 'u32[]', space=smem, size = 0x4, offset = 0x4, fixed_abs, tag = 'smem constant byte address 0x4 - core index']
  #allocation1 [shape = 'u32[144,128]{1,0:T(1,128)}', space=vmem, size = 0x12000, scoped, tag = 'internal scratch']
  #allocation2 [shape = 'f32[128,128]{1,0:T(8,128)}', space=vmem, size = 0x10000, scoped, tag = 'scratch operand']
  %s0 = inlined_call_operand.hbm [shape: bf16[128,128], index: 0, kind: input, shape index: {}]
  %s1 = inlined_call_operand.hbm [shape: bf16[128,128], index: 1, kind: input, shape index: {}]
  %s2 = inlined_call_operand.hbm [shape: bf16[128,128], index: 2, kind: output, shape index: {0}]
  %s3 = inlined_call_operand.hbm [shape: f32[8,128], index: 3, kind: output, shape index: {1}]
  %s4 = inlined_call_operand.hbm [shape: f32[8,128], index: 4, kind: output, shape index: {2}]
  %5 = xla_tuple %s2, %s3, %s4
  %s6 = sld [smem:[#allocation0]]
  $region50: #{tpu_custom_call.1} parent=0
    _
  %s8 = ssub.s32 1, %s6
  %s9 = scalar_select 0, %s8, %s6
  $region1: #{tpu_custom_call.1} parent=0
    #allocation3 [shape = 'u8[32768]{0}', space=vmem, size = 0x8000, scoped, tag = 'input window, operand 0, single buffered']
    #allocation4 [shape = 's32[1]{0}', space=sflag, size = 0x4, scoped, tag = 'scoped memory for tpu_custom_call.1']
    #allocation5 [shape = 's32[1]{0}', space=sflag, size = 0x4, scoped, tag = 'scoped memory for tpu_custom_call.1']
    #allocation6 [shape = 'u8[32768]{0}', space=vmem, size = 0x8000, scoped, tag = 'input window, operand 1, single buffered']
    #allocation7 [shape = 's32[1]{0}', space=sflag, size = 0x4, scoped, tag = 'scoped memory for tpu_custom_call.1']
    #allocation8 [shape = 'u8[32768]{0}', space=vmem, size = 0x8000, scoped, tag = 'output window, operand 0, single buffered']
    #allocation9 [shape = 'u8[4096]{0}', space=vmem, size = 0x1000, scoped, tag = 'output window, operand 1, single buffered']
    #allocation10 [shape = 's32[1]{0}', space=sflag, size = 0x4, scoped, tag = 'scoped memory for tpu_custom_call.1']
    #allocation11 [shape = 'u8[4096]{0}', space=vmem, size = 0x1000, scoped, tag = 'output window, operand 2, single buffered']
    %10 = vsyncpa [#allocation4], 0
    %11 = vsyncpa [#allocation7], 0
    %12 = vsyncpa [#allocation5], 0
    %13 = vsyncpa [#allocation10], 0
    // Predicated region
    $region2: #{tpu_custom_call.1} parent=1 // pred_check
      _
    $region3: #{tpu_custom_call.1} parent=1 // pred_check_branch
      %15 = sbr.rel (0) target = $region5
    $region4: #{tpu_custom_call.1} parent=1 // pred_region
      %s17 = ssub.s32 1024, 1024
      %18 = vsyncadd [#allocation4], %s17
      %s19 = sshll.u32 [#allocation3], 4
      %s20 = int_to_ptr.vmem [resolvable:$true] %s19
      %25 = dma.hbm_to_vmem [thread:$0]  %s0, 1024, %s20, [#allocation4], 64, 64, 4
    $region5: #{tpu_custom_call.1} parent=1 // pred_fallthru
      _
    // Predicated region
    $region6: #{tpu_custom_call.1} parent=1 // pred_check
      _
    $region7: #{tpu_custom_call.1} parent=1 // pred_check_branch
      %27 = sbr.rel (0) target = $region9
    $region8: #{tpu_custom_call.1} parent=1 // pred_region
      %s29 = ssub.s32 1024, 1024
      %30 = vsyncadd [#allocation7], %s29
      %s31 = sshll.u32 [#allocation6], 4
      %s32 = int_to_ptr.vmem [resolvable:$true] %s31
      %37 = dma.hbm_to_vmem [thread:$0]  %s1, 1024, %s32, [#allocation7], 64, 64, 4
    $region9: #{tpu_custom_call.1} parent=1 // pred_fallthru
      _
    // Predicated region
    $region10: #{tpu_custom_call.1} parent=1 // pred_check
      _
    $region11: #{tpu_custom_call.1} parent=1 // pred_check_branch
      %39 = sbr.rel (0) target = $region13
    $region12: #{tpu_custom_call.1} parent=1 // pred_region
      %40 = dma.done [#allocation4], 1024
    $region13: #{tpu_custom_call.1} parent=1 // pred_fallthru
      _
    // Predicated region
    $region14: #{tpu_custom_call.1} parent=1 // pred_check
      _
    $region15: #{tpu_custom_call.1} parent=1 // pred_check_branch
      %42 = sbr.rel (0) target = $region17
    $region16: #{tpu_custom_call.1} parent=1 // pred_region
      %43 = dma.done [#allocation7], 1024
    $region17: #{tpu_custom_call.1} parent=1 // pred_fallthru
      _
    %p45 = scmp.eq.s32.totalorder 0, 0
    // Predicated region
    $region18: #{tpu_custom_call.1} parent=1 // pred_check
      %p46 = pneg %p45
    $region19: #{tpu_custom_call.1} parent=1 // pred_check_branch
      %48 = sbr.rel (%p46) target = $region21
    $region20: #{tpu_custom_call.1} parent=1 // pred_region
      %49 = vst [vmem:[#allocation2] sm:$0xff] 0.0
      %50 = vst [vmem:[#allocation2 + $0x8] sm:$0xff] 0.0
      %51 = vst [vmem:[#allocation2 + $0x10] sm:$0xff] 0.0
      %52 = vst [vmem:[#allocation2 + $0x18] sm:$0xff] 0.0
      %53 = vst [vmem:[#allocation2 + $0x20] sm:$0xff] 0.0
      %54 = vst [vmem:[#allocation2 + $0x28] sm:$0xff] 0.0
      %55 = vst [vmem:[#allocation2 + $0x30] sm:$0xff] 0.0
      %56 = vst [vmem:[#allocation2 + $0x38] sm:$0xff] 0.0
      %57 = vst [vmem:[#allocation2 + $0x40] sm:$0xff] 0.0
      %58 = vst [vmem:[#allocation2 + $0x48] sm:$0xff] 0.0
      %59 = vst [vmem:[#allocation2 + $0x50] sm:$0xff] 0.0
      %60 = vst [vmem:[#allocation2 + $0x58] sm:$0xff] 0.0
      %61 = vst [vmem:[#allocation2 + $0x60] sm:$0xff] 0.0
      %62 = vst [vmem:[#allocation2 + $0x68] sm:$0xff] 0.0
      %63 = vst [vmem:[#allocation2 + $0x70] sm:$0xff] 0.0
      %64 = vst [vmem:[#allocation2 + $0x78] sm:$0xff] 0.0
    $region21: #{tpu_custom_call.1} parent=1 // pred_fallthru
      _
    %s65 = smul.u32 0, 128
    %v66 = vld [vmem:[#allocation2] sm:$0xff]
    %v67 = vld [vmem:[#allocation2 + $0x8] sm:$0xff]
    %v68 = vld [vmem:[#allocation2 + $0x10] sm:$0xff]
    %v69 = vld [vmem:[#allocation2 + $0x18] sm:$0xff]
    %v70 = vld [vmem:[#allocation2 + $0x20] sm:$0xff]
    %v71 = vld [vmem:[#allocation2 + $0x28] sm:$0xff]
    %v72 = vld [vmem:[#allocation2 + $0x30] sm:$0xff]
    %v73 = vld [vmem:[#allocation2 + $0x38] sm:$0xff]
    %v74 = vld [vmem:[#allocation2 + $0x40] sm:$0xff]
    %v75 = vld [vmem:[#allocation2 + $0x48] sm:$0xff]
    %v76 = vld [vmem:[#allocation2 + $0x50] sm:$0xff]
    %v77 = vld [vmem:[#allocation2 + $0x58] sm:$0xff]
    %v78 = vld [vmem:[#allocation2 + $0x60] sm:$0xff]
    %v79 = vld [vmem:[#allocation2 + $0x68] sm:$0xff]
    %v80 = vld [vmem:[#allocation2 + $0x70] sm:$0xff]
    %v81 = vld [vmem:[#allocation2 + $0x78] sm:$0xff]
    %v82 = vld [vmem:[#allocation3] sm:$0xf]
    %v83 = vld [vmem:[#allocation3 + $0x4] sm:$0xf]
    %v84 = vld [vmem:[#allocation3 + $0x8] sm:$0xf]
    %v85 = vld [vmem:[#allocation3 + $0xc] sm:$0xf]
    %v86 = vld [vmem:[#allocation3 + $0x10] sm:$0xf]
    %v87 = vld [vmem:[#allocation3 + $0x14] sm:$0xf]
    %v88 = vld [vmem:[#allocation3 + $0x18] sm:$0xf]
    %v89 = vld [vmem:[#allocation3 + $0x1c] sm:$0xf]
    %v90 = vld [vmem:[#allocation3 + $0x20] sm:$0xf]
    %v91 = vld [vmem:[#allocation3 + $0x24] sm:$0xf]
    %v92 = vld [vmem:[#allocation3 + $0x28] sm:$0xf]
    %v93 = vld [vmem:[#allocation3 + $0x2c] sm:$0xf]
    %v94 = vld [vmem:[#allocation3 + $0x30] sm:$0xf]
    %v95 = vld [vmem:[#allocation3 + $0x34] sm:$0xf]
    %v96 = vld [vmem:[#allocation3 + $0x38] sm:$0xf]
    %v97 = vld [vmem:[#allocation3 + $0x3c] sm:$0xf]
    %s98 = sshra.s32 %s65, 3
    %s99 = sand.u32 %s65, 7
    %s100 = smul.addr %s98, 4
    %s101 = scalar_lea.vmem [#allocation6], %s100
    %v102 = vld [vmem:[%s101] sm:$0xf]
    %v103 = vld [vmem:[%s101 + $0x4] sm:$0xf]
    %v104 = vld [vmem:[%s101 + $0x8] sm:$0xf]
    %v105 = vld [vmem:[%s101 + $0xc] sm:$0xf]
    %v106 = vld [vmem:[%s101 + $0x10] sm:$0xf]
    %v107 = vld [vmem:[%s101 + $0x14] sm:$0xf]
    %v108 = vld [vmem:[%s101 + $0x18] sm:$0xf]
    %v109 = vld [vmem:[%s101 + $0x1c] sm:$0xf]
    %v110 = vld [vmem:[%s101 + $0x20] sm:$0xf]
    %v111 = vld [vmem:[%s101 + $0x24] sm:$0xf]
    %v112 = vld [vmem:[%s101 + $0x28] sm:$0xf]
    %v113 = vld [vmem:[%s101 + $0x2c] sm:$0xf]
    %v114 = vld [vmem:[%s101 + $0x30] sm:$0xf]
    %v115 = vld [vmem:[%s101 + $0x34] sm:$0xf]
    %v116 = vld [vmem:[%s101 + $0x38] sm:$0xf]
    %v117 = vld [vmem:[%s101 + $0x3c] sm:$0xf]
    %v134 = vunpack.c.l.b16 %v82
    %v135 = vunpack.c.l.b16 %v83
    %v136 = vunpack.c.l.b16 %v84
    %v137 = vunpack.c.l.b16 %v85
    %v138 = vunpack.c.l.b16 %v86
    %v139 = vunpack.c.l.b16 %v87
    %v140 = vunpack.c.l.b16 %v88
    %v141 = vunpack.c.l.b16 %v89
    %v142 = vunpack.c.l.b16 %v90
    %v143 = vunpack.c.l.b16 %v91
    %v144 = vunpack.c.l.b16 %v92
    %v145 = vunpack.c.l.b16 %v93
    %v146 = vunpack.c.l.b16 %v94
    %v147 = vunpack.c.l.b16 %v95
    %v148 = vunpack.c.l.b16 %v96
    %v149 = vunpack.c.l.b16 %v97
    %v150 = vpack.c.b16 %v135, %v134
    %v151 = vpack.c.b16 %v137, %v136
    %v152 = vpack.c.b16 %v139, %v138
    %v153 = vpack.c.b16 %v141, %v140
    %v154 = vpack.c.b16 %v143, %v142
    %v155 = vpack.c.b16 %v145, %v144
    %v156 = vpack.c.b16 %v147, %v146
    %v157 = vpack.c.b16 %v149, %v148
    %v182 = vunpack.c.l.b16 %v102
    %v183 = vunpack.c.l.b16 %v103
    %v184 = vunpack.c.l.b16 %v104
    %v185 = vunpack.c.l.b16 %v105
    %v186 = vunpack.c.l.b16 %v106
    %v187 = vunpack.c.l.b16 %v107
    %v188 = vunpack.c.l.b16 %v108
    %v189 = vunpack.c.l.b16 %v109
    %v190 = vunpack.c.l.b16 %v110
    %v191 = vunpack.c.l.b16 %v111
    %v192 = vunpack.c.l.b16 %v112
    %v193 = vunpack.c.l.b16 %v113
    %v194 = vunpack.c.l.b16 %v114
    %v195 = vunpack.c.l.b16 %v115
    %v196 = vunpack.c.l.b16 %v116
    %v197 = vunpack.c.l.b16 %v117
    %v198 = vpack.c.b16 %v183, %v182
    %v199 = vpack.c.b16 %v185, %v184
    %v200 = vpack.c.b16 %v187, %v186
    %v201 = vpack.c.b16 %v189, %v188
    %v202 = vpack.c.b16 %v191, %v190
    %v203 = vpack.c.b16 %v193, %v192
    %v204 = vpack.c.b16 %v195, %v194
    %v205 = vpack.c.b16 %v197, %v196
    %214 = vmatprep.subr.bf16.mxu0 0
    %215 = vmatpush1.bf16.msra.mxu0 %v198
    %216 = vmatprep.subr.bf16.mxu0 0
    %217 = vmatpush1.bf16.msra.mxu0 %v199
    %218 = vmatprep.subr.bf16.mxu0 0
    %219 = vmatpush1.bf16.msra.mxu0 %v200
    %220 = vmatprep.subr.bf16.mxu0 0
    %221 = vmatpush1.bf16.msra.mxu0 %v201
    %222 = vmatprep.subr.bf16.mxu0 0
    %223 = vmatpush1.bf16.msra.mxu0 %v202
    %224 = vmatprep.subr.bf16.mxu0 0
    %225 = vmatpush1.bf16.msra.mxu0 %v203
    %226 = vmatprep.subr.bf16.mxu0 0
    %227 = vmatpush1.bf16.msra.mxu0 %v204
    %228 = vmatprep.subr.bf16.mxu0 0
    %229 = vmatpush1.bf16.msra.mxu0 %v205
    %230 = vmatprep.subr.bf16.mxu0 0
    %231 = vmatpush1.bf16.msra.mxu0 0
    %232 = vmatprep.subr.bf16.mxu0 0
    %233 = vmatpush1.bf16.msra.mxu0 0
    %234 = vmatprep.subr.bf16.mxu0 0
    %235 = vmatpush1.bf16.msra.mxu0 0
    %236 = vmatprep.subr.bf16.mxu0 0
    %237 = vmatpush1.bf16.msra.mxu0 0
    %238 = vmatprep.subr.bf16.mxu0 0
    %239 = vmatpush1.bf16.msra.mxu0 0
    %240 = vmatprep.subr.bf16.mxu0 0
    %241 = vmatpush1.bf16.msra.mxu0 0
    %242 = vmatprep.subr.bf16.mxu0 0
    %243 = vmatpush1.bf16.msra.mxu0 0
    %244 = vmatprep.subr.bf16.mxu0 0
    %245 = vmatpush1.bf16.msra.mxu0 0
    %246 = vmatprep.mubr.bf16.mxu0 0
    %247 = vmatmul.mubr.bf16.gmra.mrb[0].mxu0 %v150
    %v248 = vpop.f32.mrb[0].mxu0
    %v249 = vadd.f32 0.0, %v248
    %v250 = vpop.f32.mrb[0].mxu0
    %v251 = vpop.f32.mrb[0].mxu0
    %v252 = vadd.f32 0.0, %v251
    %v253 = vpop.f32.mrb[0].mxu0
    %254 = vmatprep.mubr.bf16.mxu0 0
    %255 = vmatmul.mubr.bf16.gmra.mrb[0].mxu0 %v151
    %v256 = vpop.f32.mrb[0].mxu0
    %v257 = vadd.f32 0.0, %v256
    %v258 = vpop.f32.mrb[0].mxu0
    %v259 = vpop.f32.mrb[0].mxu0
    %v260 = vadd.f32 0.0, %v259
    %v261 = vpop.f32.mrb[0].mxu0
    %262 = vmatprep.mubr.bf16.mxu0 0
    %263 = vmatmul.mubr.bf16.gmra.mrb[0].mxu0 %v152
    %v264 = vpop.f32.mrb[0].mxu0
    %v265 = vadd.f32 0.0, %v264
    %v266 = vpop.f32.mrb[0].mxu0
    %v267 = vpop.f32.mrb[0].mxu0
    %v268 = vadd.f32 0.0, %v267
    %v269 = vpop.f32.mrb[0].mxu0
    %270 = vmatprep.mubr.bf16.mxu0 0
    %271 = vmatmul.mubr.bf16.gmra.mrb[0].mxu0 %v153
    %v272 = vpop.f32.mrb[0].mxu0
    %v273 = vadd.f32 0.0, %v272
    %v274 = vpop.f32.mrb[0].mxu0
    %v275 = vpop.f32.mrb[0].mxu0
    %v276 = vadd.f32 0.0, %v275
    %v277 = vpop.f32.mrb[0].mxu0
    %278 = vmatprep.mubr.bf16.mxu0 0
    %279 = vmatmul.mubr.bf16.gmra.mrb[0].mxu0 %v154
    %v280 = vpop.f32.mrb[0].mxu0
    %v281 = vadd.f32 0.0, %v280
    %v282 = vpop.f32.mrb[0].mxu0
    %v283 = vpop.f32.mrb[0].mxu0
    %v284 = vadd.f32 0.0, %v283
    %v285 = vpop.f32.mrb[0].mxu0
    %286 = vmatprep.mubr.bf16.mxu0 0
    %287 = vmatmul.mubr.bf16.gmra.mrb[0].mxu0 %v155
    %v288 = vpop.f32.mrb[0].mxu0
    %v289 = vadd.f32 0.0, %v288
    %v290 = vpop.f32.mrb[0].mxu0
    %v291 = vpop.f32.mrb[0].mxu0
    %v292 = vadd.f32 0.0, %v291
    %v293 = vpop.f32.mrb[0].mxu0
    %294 = vmatprep.mubr.bf16.mxu0 0
    %295 = vmatmul.mubr.bf16.gmra.mrb[0].mxu0 %v156
    %v296 = vpop.f32.mrb[0].mxu0
    %v297 = vadd.f32 0.0, %v296
    %v298 = vpop.f32.mrb[0].mxu0
    %v299 = vpop.f32.mrb[0].mxu0
    %v300 = vadd.f32 0.0, %v299
    %v301 = vpop.f32.mrb[0].mxu0
    %302 = vmatprep.mubr.bf16.mxu0 0
    %303 = vmatmul.mubr.bf16.gmra.mrb[0].mxu0 %v157
    %v304 = vpop.f32.mrb[0].mxu0
    %v305 = vadd.f32 0.0, %v304
    %v306 = vpop.f32.mrb[0].mxu0
    %v307 = vpop.f32.mrb[0].mxu0
    %v308 = vadd.f32 0.0, %v307
    %v309 = vpop.f32.mrb[0].mxu0
    %310 = vdwg.mxu0
    %v311 = vadd.f32 %v66, %v249
    %v312 = vadd.f32 %v67, %v252
    %v313 = vadd.f32 %v68, %v257
    %v314 = vadd.f32 %v69, %v260
    %v315 = vadd.f32 %v70, %v265
    %v316 = vadd.f32 %v71, %v268
    %v317 = vadd.f32 %v72, %v273
    %v318 = vadd.f32 %v73, %v276
    %v319 = vadd.f32 %v74, %v281
    %v320 = vadd.f32 %v75, %v284
    %v321 = vadd.f32 %v76, %v289
    %v322 = vadd.f32 %v77, %v292
    %v323 = vadd.f32 %v78, %v297
    %v324 = vadd.f32 %v79, %v300
    %v325 = vadd.f32 %v80, %v305
    %v326 = vadd.f32 %v81, %v308
    %327 = vst [vmem:[#allocation2] sm:$0xff] %v311
    %328 = vst [vmem:[#allocation2 + $0x8] sm:$0xff] %v312
    %329 = vst [vmem:[#allocation2 + $0x10] sm:$0xff] %v313
    %330 = vst [vmem:[#allocation2 + $0x18] sm:$0xff] %v314
    %331 = vst [vmem:[#allocation2 + $0x20] sm:$0xff] %v315
    %332 = vst [vmem:[#allocation2 + $0x28] sm:$0xff] %v316
    %333 = vst [vmem:[#allocation2 + $0x30] sm:$0xff] %v317
    %334 = vst [vmem:[#allocation2 + $0x38] sm:$0xff] %v318
    %335 = vst [vmem:[#allocation2 + $0x40] sm:$0xff] %v319
    %336 = vst [vmem:[#allocation2 + $0x48] sm:$0xff] %v320
    %337 = vst [vmem:[#allocation2 + $0x50] sm:$0xff] %v321
    %338 = vst [vmem:[#allocation2 + $0x58] sm:$0xff] %v322
    %339 = vst [vmem:[#allocation2 + $0x60] sm:$0xff] %v323
    %340 = vst [vmem:[#allocation2 + $0x68] sm:$0xff] %v324
    %341 = vst [vmem:[#allocation2 + $0x70] sm:$0xff] %v325
    %342 = vst [vmem:[#allocation2 + $0x78] sm:$0xff] %v326
    // Predicated region
    $region22: #{tpu_custom_call.1} parent=1 // pred_check
      %p343 = pneg %p45
    $region23: #{tpu_custom_call.1} parent=1 // pred_check_branch
      %345 = sbr.rel (%p343) target = $region25
    $region24: #{tpu_custom_call.1} parent=1 // pred_region
      %v346 = vld [vmem:[#allocation2] sm:$0xff]
      %v347 = vld [vmem:[#allocation2 + $0x8] sm:$0xff]
      %v348 = vld [vmem:[#allocation2 + $0x10] sm:$0xff]
      %v349 = vld [vmem:[#allocation2 + $0x18] sm:$0xff]
      %v350 = vld [vmem:[#allocation2 + $0x20] sm:$0xff]
      %v351 = vld [vmem:[#allocation2 + $0x28] sm:$0xff]
      %v352 = vld [vmem:[#allocation2 + $0x30] sm:$0xff]
      %v353 = vld [vmem:[#allocation2 + $0x38] sm:$0xff]
      %v354 = vld [vmem:[#allocation2 + $0x40] sm:$0xff]
      %v355 = vld [vmem:[#allocation2 + $0x48] sm:$0xff]
      %v356 = vld [vmem:[#allocation2 + $0x50] sm:$0xff]
      %v357 = vld [vmem:[#allocation2 + $0x58] sm:$0xff]
      %v358 = vld [vmem:[#allocation2 + $0x60] sm:$0xff]
      %v359 = vld [vmem:[#allocation2 + $0x68] sm:$0xff]
      %v360 = vld [vmem:[#allocation2 + $0x70] sm:$0xff]
      %v361 = vld [vmem:[#allocation2 + $0x78] sm:$0xff]
      %v362 = vpack.c.bf16 %v347, %v346
      %v363 = vpack.c.bf16 %v349, %v348
      %v364 = vpack.c.bf16 %v351, %v350
      %v365 = vpack.c.bf16 %v353, %v352
      %v366 = vpack.c.bf16 %v355, %v354
      %v367 = vpack.c.bf16 %v357, %v356
      %v368 = vpack.c.bf16 %v359, %v358
      %v369 = vpack.c.bf16 %v361, %v360
      %v378 = vunpack.c.l.b16 %v362
      %v379 = vunpack.c.h.b16 %v362
      %v380 = vunpack.c.l.b16 %v363
      %v381 = vunpack.c.h.b16 %v363
      %v382 = vunpack.c.l.b16 %v364
      %v383 = vunpack.c.h.b16 %v364
      %v384 = vunpack.c.l.b16 %v365
      %v385 = vunpack.c.h.b16 %v365
      %v386 = vunpack.c.l.b16 %v366
      %v387 = vunpack.c.h.b16 %v366
      %v388 = vunpack.c.l.b16 %v367
      %v389 = vunpack.c.h.b16 %v367
      %v390 = vunpack.c.l.b16 %v368
      %v391 = vunpack.c.h.b16 %v368
      %v392 = vunpack.c.l.b16 %v369
      %v393 = vunpack.c.h.b16 %v369
      %v394 = vpack.c.b16 %v378, %v378
      %v395 = vpack.c.b16 %v379, %v379
      %v396 = vpack.c.b16 %v380, %v380
      %v397 = vpack.c.b16 %v381, %v381
      %v398 = vpack.c.b16 %v382, %v382
      %v399 = vpack.c.b16 %v383, %v383
      %v400 = vpack.c.b16 %v384, %v384
      %v401 = vpack.c.b16 %v385, %v385
      %v402 = vpack.c.b16 %v386, %v386
      %v403 = vpack.c.b16 %v387, %v387
      %v404 = vpack.c.b16 %v388, %v388
      %v405 = vpack.c.b16 %v389, %v389
      %v406 = vpack.c.b16 %v390, %v390
      %v407 = vpack.c.b16 %v391, %v391
      %v408 = vpack.c.b16 %v392, %v392
      %v409 = vpack.c.b16 %v393, %v393
      %426 = vst [vmem:[#allocation8] sm:$0xf] %v394
      %427 = vst [vmem:[#allocation8 + $0x4] sm:$0xf] %v395
      %428 = vst [vmem:[#allocation8 + $0x8] sm:$0xf] %v396
      %429 = vst [vmem:[#allocation8 + $0xc] sm:$0xf] %v397
      %430 = vst [vmem:[#allocation8 + $0x10] sm:$0xf] %v398
      %431 = vst [vmem:[#allocation8 + $0x14] sm:$0xf] %v399
      %432 = vst [vmem:[#allocation8 + $0x18] sm:$0xf] %v400
      %433 = vst [vmem:[#allocation8 + $0x1c] sm:$0xf] %v401
      %434 = vst [vmem:[#allocation8 + $0x20] sm:$0xf] %v402
      %435 = vst [vmem:[#allocation8 + $0x24] sm:$0xf] %v403
      %436 = vst [vmem:[#allocation8 + $0x28] sm:$0xf] %v404
      %437 = vst [vmem:[#allocation8 + $0x2c] sm:$0xf] %v405
      %438 = vst [vmem:[#allocation8 + $0x30] sm:$0xf] %v406
      %439 = vst [vmem:[#allocation8 + $0x34] sm:$0xf] %v407
      %440 = vst [vmem:[#allocation8 + $0x38] sm:$0xf] %v408
      %441 = vst [vmem:[#allocation8 + $0x3c] sm:$0xf] %v409
      %v442 = vlaneseq
      %v443 = vshrl.u32 %v442, 7
      %vm444 = vcmp.eq.s32.totalorder %v443, 0
      %v445 = vsel %vm444, 1, 0
      %v446 = vcvt.s32.f32 %v445
      %v447 = vadd.f32 %v346, %v347
      %v448 = vadd.f32 %v447, %v348
      %v449 = vadd.f32 %v448, %v349
      %v450 = vadd.f32 %v449, %v350
      %v451 = vadd.f32 %v450, %v351
      %v452 = vadd.f32 %v451, %v352
      %v453 = vadd.f32 %v452, %v353
      %v454 = vadd.f32 %v453, %v354
      %v455 = vadd.f32 %v454, %v355
      %v456 = vadd.f32 %v455, %v356
      %v457 = vadd.f32 %v456, %v357
      %v458 = vadd.f32 %v457, %v358
      %v459 = vadd.f32 %v458, %v359
      %v460 = vadd.f32 %v459, %v360
      %v461 = vadd.f32 %v460, %v361
      %v462 = vrot.slane %v461, 4
      %v463 = vadd.f32 %v461, %v462
      %v464 = vrot.slane %v463, 2
      %v465 = vadd.f32 %v463, %v464
      %v466 = vrot.slane %v465, 1
      %v467 = vadd.f32 %v465, %v466
      %v468 = vmul.f32 %v446, %v467
      %469 = vst [vmem:[#allocation9] sm:$0xff] %v468
      %v470 = vmul.f32 %v346, %v346
      %v471 = vmul.f32 %v347, %v347
      %v472 = vmul.f32 %v348, %v348
      %v473 = vmul.f32 %v349, %v349
      %v474 = vmul.f32 %v350, %v350
      %v475 = vmul.f32 %v351, %v351
      %v476 = vmul.f32 %v352, %v352
      %v477 = vmul.f32 %v353, %v353
      %v478 = vmul.f32 %v354, %v354
      %v479 = vmul.f32 %v355, %v355
      %v480 = vmul.f32 %v356, %v356
      %v481 = vmul.f32 %v357, %v357
      %v482 = vmul.f32 %v358, %v358
      %v483 = vmul.f32 %v359, %v359
      %v484 = vmul.f32 %v360, %v360
      %v485 = vmul.f32 %v361, %v361
      %v486 = vadd.f32 %v470, %v471
      %v487 = vadd.f32 %v486, %v472
      %v488 = vadd.f32 %v487, %v473
      %v489 = vadd.f32 %v488, %v474
      %v490 = vadd.f32 %v489, %v475
      %v491 = vadd.f32 %v490, %v476
      %v492 = vadd.f32 %v491, %v477
      %v493 = vadd.f32 %v492, %v478
      %v494 = vadd.f32 %v493, %v479
      %v495 = vadd.f32 %v494, %v480
      %v496 = vadd.f32 %v495, %v481
      %v497 = vadd.f32 %v496, %v482
      %v498 = vadd.f32 %v497, %v483
      %v499 = vadd.f32 %v498, %v484
      %v500 = vadd.f32 %v499, %v485
      %v501 = vrot.slane %v500, 4
      %v502 = vadd.f32 %v500, %v501
      %v503 = vrot.slane %v502, 2
      %v504 = vadd.f32 %v502, %v503
      %v505 = vrot.slane %v504, 1
      %v506 = vadd.f32 %v504, %v505
      %v507 = vmul.f32 %v446, %v506
      %508 = vst [vmem:[#allocation11] sm:$0xff] %v507
    $region25: #{tpu_custom_call.1} parent=1 // pred_fallthru
      _
    // Predicated region
    $region26: #{tpu_custom_call.1} parent=1 // pred_check
      _
    $region27: #{tpu_custom_call.1} parent=1 // pred_check_branch
      %510 = sbr.rel (0) target = $region29
    $region28: #{tpu_custom_call.1} parent=1 // pred_region
      %s512 = ssub.s32 1024, 1024
      %513 = vsyncadd [#allocation5], %s512
      %s514 = sshll.u32 [#allocation8], 4
      %s515 = int_to_ptr.vmem [resolvable:$true] %s514
      %520 = dma.vmem_to_hbm [thread:$0]  %s515, 1024, %s2, [#allocation5], 64, 64, 4
    $region29: #{tpu_custom_call.1} parent=1 // pred_fallthru
      _
    // Predicated region
    $region30: #{tpu_custom_call.1} parent=1 // pred_check
      _
    $region31: #{tpu_custom_call.1} parent=1 // pred_check_branch
      %522 = sbr.rel (0) target = $region33
    $region32: #{tpu_custom_call.1} parent=1 // pred_region
      %s524 = ssub.s32 128, 128
      %525 = vsyncadd [#allocation10], %s524
      %s527 = sshll.u32 [#allocation9], 4
      %s528 = int_to_ptr.vmem [resolvable:$true] %s527
      %530 = dma.vmem_to_hbm [thread:$0]  %s528, 128, %s3, [#allocation10]
    $region33: #{tpu_custom_call.1} parent=1 // pred_fallthru
      _
    // Predicated region
    $region34: #{tpu_custom_call.1} parent=1 // pred_check
      _
    $region35: #{tpu_custom_call.1} parent=1 // pred_check_branch
      %532 = sbr.rel (0) target = $region37
    $region36: #{tpu_custom_call.1} parent=1 // pred_region
      %s534 = ssub.s32 128, 128
      %535 = vsyncadd [#allocation10], %s534
      %s537 = sshll.u32 [#allocation11], 4
      %s538 = int_to_ptr.vmem [resolvable:$true] %s537
      %540 = dma.vmem_to_hbm [thread:$0]  %s538, 128, %s4, [#allocation10]
    $region37: #{tpu_custom_call.1} parent=1 // pred_fallthru
      _
    // Predicated region
    $region38: #{tpu_custom_call.1} parent=1 // pred_check
      _
    $region39: #{tpu_custom_call.1} parent=1 // pred_check_branch
      %542 = sbr.rel (0) target = $region41
    $region40: #{tpu_custom_call.1} parent=1 // pred_region
      %543 = dma.done [#allocation5], 1024
    $region41: #{tpu_custom_call.1} parent=1 // pred_fallthru
      _
    // Predicated region
    $region42: #{tpu_custom_call.1} parent=1 // pred_check
      _
    $region43: #{tpu_custom_call.1} parent=1 // pred_check_branch
      %545 = sbr.rel (0) target = $region45
    $region44: #{tpu_custom_call.1} parent=1 // pred_region
      %546 = dma.done [#allocation10], 128
    $region45: #{tpu_custom_call.1} parent=1 // pred_fallthru
      _
    // Predicated region
    $region46: #{tpu_custom_call.1} parent=1 // pred_check
      _
    $region47: #{tpu_custom_call.1} parent=1 // pred_check_branch
      %548 = sbr.rel (0) target = $region49
    $region48: #{tpu_custom_call.1} parent=1 // pred_region
      %549 = dma.done [#allocation10], 128
    $region49: #{tpu_custom_call.1} parent=1 // pred_fallthru
      _
    %550 = vsyncpa [#allocation4], 1
    %551 = vsyncpa [#allocation7], 1
    %552 = vsyncpa [#allocation5], 1
    %553 = vsyncpa [#allocation10], 1

</llo_original>
